<compile_context>
chip_gen: v5e
topology: v5e:2x2
jax: 0.10.0
libtpu: 0.0.40
codegen_flags: <defaults>
</compile_context>

<pallas_src>
import jax
import jax.numpy as jnp
from jax.experimental import pallas as pl
from jax.experimental.pallas import tpu as pltpu

LANE = 128  # vreg lane width


def _round_up(n, m):
    return (n + m - 1) // m * m


def _vmem_capacity_bytes():
    try:
        return int(pltpu.get_tpu_info().vmem_capacity_bytes)
    except Exception:
        return 64 << 20  # v7x-safe default (per-core)


def _pad2(a, rows, cols):
    if a.shape == (rows, cols):
        return a
    return jnp.zeros((rows, cols), a.dtype).at[: a.shape[0], : a.shape[1]].set(a)


# --------------------------------------------------------------------------- #
# Kernels
# --------------------------------------------------------------------------- #
def mlp_kernel_resident(x_ref, w1_ref, b1_ref, w2_ref, b2_ref, o_ref):
    """Whole hidden dim resident in VMEM: one fused pass per batch tile."""
    x = x_ref[...].astype(w1_ref.dtype)           # MXU input dtype set by prepare()
    h = jnp.dot(x, w1_ref[...], preferred_element_type=jnp.float32)
    h = jnp.maximum(h + b1_ref[...], 0.0)          # f32 bias + ReLU on the VPU
    out = jnp.dot(h.astype(w2_ref.dtype), w2_ref[...],
                  preferred_element_type=jnp.float32)
    o_ref[...] = (out + b2_ref[...]).astype(o_ref.dtype)


def mlp_kernel_ktiled(x_ref, w1_ref, b1_ref, w2_ref, b2_ref, o_ref, acc_ref):
    """Hidden dim tiled along an inner 'arbitrary' grid axis; f32 accumulator."""
    k = pl.program_id(1)

    @pl.when(k == 0)
    def _():
        acc_ref[...] = jnp.zeros_like(acc_ref)

    x = x_ref[...].astype(w1_ref.dtype)
    h = jnp.dot(x, w1_ref[...], preferred_element_type=jnp.float32)
    h = jnp.maximum(h + b1_ref[...], 0.0)
    acc_ref[...] += jnp.dot(h.astype(w2_ref.dtype), w2_ref[...],
                            preferred_element_type=jnp.float32)

    @pl.when(k == pl.num_programs(1) - 1)
    def _():
        o_ref[...] = (acc_ref[...] + b2_ref[...]).astype(o_ref.dtype)


# --------------------------------------------------------------------------- #
# VMEM budgeting / tiling selection
# --------------------------------------------------------------------------- #
def _footprint_bytes(block_m, dim_p, hid_tile, proj_p, hid_p, x_item, w_item):
    resident = hid_tile == hid_p
    n_wbuf = 1 if resident else 2              # resident weights single-buffered
    x_tile = 2 * block_m * dim_p * x_item       # double-buffered x tile
    x_cast = block_m * dim_p * w_item if w_item != x_item else 0
    o_tile = 2 * block_m * proj_p * x_item      # double-buffered out tile
    weights = n_wbuf * (dim_p * hid_tile + hid_tile * proj_p) * w_item
    biases = n_wbuf * hid_tile * 4 + proj_p * 4
    h_f32 = block_m * hid_tile * 4
    h_cast = block_m * hid_tile * w_item if w_item < 4 else 0
    acc = block_m * proj_p * 4
    return x_tile + x_cast + o_tile + weights + biases + h_f32 + h_cast + acc


def _select_tiling(batch, dim_p, hid_p, proj_p, x_item, w_item, sub,
                   block_m, hidden_block):
    vmem_cap = _vmem_capacity_bytes()
    budget = int(0.6 * vmem_cap)

    def fits(bm, ht):
        return _footprint_bytes(bm, dim_p, ht, proj_p, hid_p, x_item, w_item) <= budget

    ht0 = hid_p if hidden_block is None else hidden_block

    # Batch tile: start big (amortize ~0.35us/step), sublane-aligned, never
    # larger than the batch, and not so big the grid collapses (megacore).
    block_m = max(sub, min(block_m, _round_up(batch, sub)))
    block_m = _round_up(block_m, sub)
    if batch >= 4 * 128:
        block_m = min(block_m, max(128, _round_up(-(-batch // 4), sub)))
    while block_m > sub and not fits(block_m, ht0):
        block_m = max(sub, _round_up(block_m // 2, sub))

    # Hidden tiling fallback (v7x 64 MiB): largest divisor tile that fits.
    if hidden_block is not None:
        hid_tile = hidden_block
    elif fits(block_m, hid_p):
        hid_tile = hid_p
    else:
        m = hid_p // LANE
        hid_tile = LANE
        for d in range(m - 1, 0, -1):
            if m % d == 0 and fits(block_m, d * LANE):
                hid_tile = d * LANE
                break
    return block_m, hid_tile, vmem_cap


# --------------------------------------------------------------------------- #
# Params preparation (done ONCE, not per call) + forward
# --------------------------------------------------------------------------- #
def prepare_mlp_params(w1, b1, w2, b2, *, use_bf16_mxu=False):
    """Pad weights/biases once to lane-dense shapes; optionally cast weights to
    bf16 for the MXU (explicit flag, f32 accumulation in-kernel). Weights are
    stored [in_features, out_features] (PyTorch W^T); biases are kept f32."""
    dim, hidden = w1.shape
    proj = w2.shape[1]
    dim_p, hid_p, proj_p = (_round_up(n, LANE) for n in (dim, hidden, proj))
    w_dtype = jnp.bfloat16 if use_bf16_mxu else w1.dtype
    return dict(
        w1=_pad2(w1.astype(w_dtype), dim_p, hid_p),
        b1=_pad2(b1.astype(jnp.float32).reshape(1, -1), 1, hid_p),
        w2=_pad2(w2.astype(w_dtype), hid_p, proj_p),
        b2=_pad2(b2.astype(jnp.float32).reshape(1, -1), 1, proj_p),
        dims=(dim, hidden, proj),
        padded=(dim_p, hid_p, proj_p),
    )


def mlp_forward(x, params, *, block_m=512, hidden_block=None):
    """Fused MLP forward: relu(x @ w1 + b1) @ w2 + b2 on pre-padded params."""
    w1_p, b1_p, w2_p, b2_p = params["w1"], params["b1"], params["w2"], params["b2"]
    dim, hidden, proj = params["dims"]
    dim_p, hid_p, proj_p = params["padded"]
    batch = x.shape[0]
    out_dtype = x.dtype
    x_item = jnp.dtype(x.dtype).itemsize
    w_item = jnp.dtype(w1_p.dtype).itemsize
    sub = 16 if x.dtype == jnp.bfloat16 else 8

    if hidden_block is not None:
        assert hidden_block % LANE == 0 and hid_p % hidden_block == 0

    block_m, hid_tile, vmem_cap = _select_tiling(
        batch, dim_p, hid_p, proj_p, x_item, w_item, sub, block_m, hidden_block)

    batch_p = _round_up(batch, block_m)
    # Only pad x when it is not already tile-aligned (saves a full HBM pass).
    if (batch_p, dim_p) == x.shape:
        x_p = x
    else:
        x_p = jnp.zeros((batch_p, dim_p), x.dtype).at[:batch, :dim].set(x)

    num_m = batch_p // block_m
    num_k = hid_p // hid_tile

    footprint = _footprint_bytes(block_m, dim_p, hid_tile, proj_p, hid_p,
                                 x_item, w_item)
    vmem_limit = int(min(0.9 * vmem_cap, max(32 << 20, 2 * footprint)))

    flops = 2 * batch_p * (dim_p * hid_p + hid_p * proj_p)
    bytes_accessed = (batch_p * dim_p * x_item
                      + (dim_p * hid_p + hid_p * proj_p) * w_item
                      + (hid_p + proj_p) * 4
                      + batch_p * proj_p * x_item)
    cost = pl.CostEstimate(flops=flops, transcendentals=0,
                           bytes_accessed=bytes_accessed)

    def build(single_buffer_resident):
        res_mode = pl.Buffered(1) if single_buffer_resident else None
        if num_k == 1:
            in_specs = [
                pl.BlockSpec((block_m, dim_p), lambda i: (i, 0)),
                pl.BlockSpec((dim_p, hid_p), lambda i: (0, 0), pipeline_mode=res_mode),
                pl.BlockSpec((1, hid_p), lambda i: (0, 0), pipeline_mode=res_mode),
                pl.BlockSpec((hid_p, proj_p), lambda i: (0, 0), pipeline_mode=res_mode),
                pl.BlockSpec((1, proj_p), lambda i: (0, 0), pipeline_mode=res_mode),
            ]
            out_spec = pl.BlockSpec((block_m, proj_p), lambda i: (i, 0))
            grid, kernel, scratch = (num_m,), mlp_kernel_resident, []
            sem = ("parallel",)
        else:
            in_specs = [
                pl.BlockSpec((block_m, dim_p), lambda i, k: (i, 0)),
                pl.BlockSpec((dim_p, hid_tile), lambda i, k: (0, k)),
                pl.BlockSpec((1, hid_tile), lambda i, k: (0, k)),
                pl.BlockSpec((hid_tile, proj_p), lambda i, k: (k, 0)),
                pl.BlockSpec((1, proj_p), lambda i, k: (0, 0), pipeline_mode=res_mode),
            ]
            out_spec = pl.BlockSpec((block_m, proj_p), lambda i, k: (i, 0))
            grid, kernel = (num_m, num_k), mlp_kernel_ktiled
            scratch = [pltpu.VMEM((block_m, proj_p), jnp.float32)]
            sem = ("parallel", "arbitrary")
        return pl.pallas_call(
            kernel,
            out_shape=jax.ShapeDtypeStruct((batch_p, proj_p), out_dtype),
            grid_spec=pltpu.PrefetchScalarGridSpec(
                num_scalar_prefetch=0, grid=grid, in_specs=in_specs,
                out_specs=out_spec, scratch_shapes=scratch),
            compiler_params=pltpu.CompilerParams(
                dimension_semantics=sem, vmem_limit_bytes=vmem_limit),
            cost_estimate=cost,
        )(x_p, w1_p, b1_p, w2_p, b2_p)

    try:
        out_p = build(True)
    except Exception:
        # Fallback if this jax build rejects pl.Buffered(1) on resident operands.
        out_p = build(False)

    if batch_p == batch and proj_p == proj:
        return out_p            # aligned shapes: no extra HBM pass
    return out_p[:batch, :proj]


def init_mlp_params(key, dim, projection_size, hidden_size, dtype=jnp.float32):
    """Deterministic init matching nn.Linear shapes (W stored transposed)."""
    k1, k2, k3, k4 = jax.random.split(key, 4)
    lim1 = 1.0 / jnp.sqrt(dim)
    lim2 = 1.0 / jnp.sqrt(hidden_size)
    w1 = jax.random.uniform(k1, (dim, hidden_size), dtype, -lim1, lim1)
    b1 = jax.random.uniform(k2, (hidden_size,), dtype, -lim1, lim1)
    w2 = jax.random.uniform(k3, (hidden_size, projection_size), dtype, -lim2, lim2)
    b2 = jax.random.uniform(k4, (projection_size,), dtype, -lim2, lim2)
    return w1, b1, w2, b2


if __name__ == "__main__":
    # Shapes consistent with MLP(dim, projection_size, hidden_size).
    batch, dim, hidden, proj = 256, 32, 64, 16

    key = jax.random.PRNGKey(0)
    kx, kp = jax.random.split(key)
    x = jax.random.normal(kx, (batch, dim), jnp.float32)
    w1, b1, w2, b2 = init_mlp_params(kp, dim, proj, hidden)
    ref = jnp.maximum(x @ w1 + b1, 0.0) @ w2 + b2

    # f32 path (exact), weights prepared once.
    params = prepare_mlp_params(w1, b1, w2, b2)
    out = jax.block_until_ready(mlp_forward(x, params))
    assert out.shape == (batch, proj)
    assert jnp.allclose(out, ref, atol=1e-5, rtol=1e-5)

    # Explicit bf16-MXU path (f32 accumulation in-kernel): looser tolerance.
    params_bf = prepare_mlp_params(w1, b1, w2, b2, use_bf16_mxu=True)
    out_bf = jax.block_until_ready(mlp_forward(x, params_bf))
    assert out_bf.shape == (batch, proj)
    assert jnp.allclose(out_bf, ref, atol=1e-1, rtol=1e-1)

    # Exercise the hidden-tiled accumulator path (and the zero-copy aligned path).
    dim2, hidden2, proj2, batch2 = 128, 256, 128, 64
    w1b, b1b, w2b, b2b = init_mlp_params(jax.random.PRNGKey(1), dim2, proj2, hidden2)
    x2 = jax.random.normal(jax.random.PRNGKey(2), (batch2, dim2), jnp.float32)
    ref2 = jnp.maximum(x2 @ w1b + b1b, 0.0) @ w2b + b2b
    params2 = prepare_mlp_params(w1b, b1b, w2b, b2b)
    out2 = jax.block_until_ready(mlp_forward(x2, params2, hidden_block=128))
    assert out2.shape == (batch2, proj2)
    assert jnp.allclose(out2, ref2, atol=1e-3, rtol=1e-3)

    print("KERNEL_OK")
</pallas_src>

<mosaic_0001>
module attributes {stable_mosaic.version = 11 : i64} {
  func.func @mlp_kernel_resident(%arg0: i32, %arg1: memref<256x128xf32, #tpu.memory_space<vmem>>, %arg2: memref<128x128xf32, #tpu.memory_space<vmem>>, %arg3: memref<1x128xf32, #tpu.memory_space<vmem>>, %arg4: memref<128x128xf32, #tpu.memory_space<vmem>>, %arg5: memref<1x128xf32, #tpu.memory_space<vmem>>, %arg6: memref<256x128xf32, #tpu.memory_space<vmem>>) attributes {dimension_semantics = [#tpu.dimension_semantics<parallel>], iteration_bounds = array<i64: 1>, scalar_prefetch = 0 : i64, scratch_operands = 0 : i64, tpu.core_type = #tpu.core_type<tc>, window_params = [{transform_indices = @transform_0, window_bounds = array<i64: 256, 128>}, {pipeline_mode = #tpu.pipeline_mode<synchronous>, transform_indices = @transform_1, window_bounds = array<i64: 128, 128>}, {pipeline_mode = #tpu.pipeline_mode<synchronous>, transform_indices = @transform_2, window_bounds = array<i64: 1, 128>}, {pipeline_mode = #tpu.pipeline_mode<synchronous>, transform_indices = @transform_3, window_bounds = array<i64: 128, 128>}, {pipeline_mode = #tpu.pipeline_mode<synchronous>, transform_indices = @transform_4, window_bounds = array<i64: 1, 128>}, {transform_indices = @transform_5, window_bounds = array<i64: 256, 128>}]} {
    %c0 = arith.constant 0 : index
    %c0_0 = arith.constant 0 : index
    %0 = vector.load %arg1[%c0, %c0_0] : memref<256x128xf32, #tpu.memory_space<vmem>>, vector<256x128xf32>
    %c0_1 = arith.constant 0 : index
    %c0_2 = arith.constant 0 : index
    %1 = vector.load %arg2[%c0_1, %c0_2] : memref<128x128xf32, #tpu.memory_space<vmem>>, vector<128x128xf32>
    %cst = arith.constant dense<0.000000e+00> : vector<256x128xf32>
    %2 = tpu.matmul %0, %1, %cst {dimension_numbers = #tpu.dot_dimension_numbers<[1], [0], [0], [1], [0, 0, 1, 1], [], []>} : vector<256x128xf32>, vector<128x128xf32>, vector<256x128xf32> -> vector<256x128xf32>
    %c0_3 = arith.constant 0 : index
    %c0_4 = arith.constant 0 : index
    %3 = vector.load %arg3[%c0_3, %c0_4] : memref<1x128xf32, #tpu.memory_space<vmem>>, vector<1x128xf32>
    %4 = vector.broadcast %3 : vector<1x128xf32> to vector<256x128xf32>
    %5 = arith.addf %2, %4 : vector<256x128xf32>
    %cst_5 = arith.constant 0.000000e+00 : f32
    %6 = vector.broadcast %cst_5 : f32 to vector<256x128xf32>
    %7 = arith.maximumf %5, %6 : vector<256x128xf32>
    %c0_6 = arith.constant 0 : index
    %c0_7 = arith.constant 0 : index
    %8 = vector.load %arg4[%c0_6, %c0_7] : memref<128x128xf32, #tpu.memory_space<vmem>>, vector<128x128xf32>
    %cst_8 = arith.constant dense<0.000000e+00> : vector<256x128xf32>
    %9 = tpu.matmul %7, %8, %cst_8 {dimension_numbers = #tpu.dot_dimension_numbers<[1], [0], [0], [1], [0, 0, 1, 1], [], []>} : vector<256x128xf32>, vector<128x128xf32>, vector<256x128xf32> -> vector<256x128xf32>
    %c0_9 = arith.constant 0 : index
    %c0_10 = arith.constant 0 : index
    %10 = vector.load %arg5[%c0_9, %c0_10] : memref<1x128xf32, #tpu.memory_space<vmem>>, vector<1x128xf32>
    %11 = vector.broadcast %10 : vector<1x128xf32> to vector<256x128xf32>
    %12 = arith.addf %9, %11 : vector<256x128xf32>
    %c0_11 = arith.constant 0 : index
    %c0_12 = arith.constant 0 : index
    %13 = vector.load %arg6[%c0_11, %c0_12] : memref<256x128xf32, #tpu.memory_space<vmem>>, vector<256x128xf32>
    tpu.vector_store %arg6[%c0_11, %c0_12], %12 {strides = array<i32>} : memref<256x128xf32, #tpu.memory_space<vmem>>, vector<256x128xf32>,
    return
  }
  func.func @transform_0(%arg0: i32) -> (i32, i32) {
    %c0_i32 = arith.constant 0 : i32
    %c0_i32_0 = arith.constant 0 : i32
    return %arg0, %c0_i32 : i32, i32
  }
  func.func @transform_1(%arg0: i32) -> (i32, i32) {
    %c0_i32 = arith.constant 0 : i32
    %c0_i32_0 = arith.constant 0 : i32
    %c0_i32_1 = arith.constant 0 : i32
    return %c0_i32, %c0_i32_0 : i32, i32
  }
  func.func @transform_2(%arg0: i32) -> (i32, i32) {
    %c0_i32 = arith.constant 0 : i32
    %c0_i32_0 = arith.constant 0 : i32
    %c0_i32_1 = arith.constant 0 : i32
    return %c0_i32, %c0_i32_0 : i32, i32
  }
  func.func @transform_3(%arg0: i32) -> (i32, i32) {
    %c0_i32 = arith.constant 0 : i32
    %c0_i32_0 = arith.constant 0 : i32
    %c0_i32_1 = arith.constant 0 : i32
    return %c0_i32, %c0_i32_0 : i32, i32
  }
  func.func @transform_4(%arg0: i32) -> (i32, i32) {
    %c0_i32 = arith.constant 0 : i32
    %c0_i32_0 = arith.constant 0 : i32
    %c0_i32_1 = arith.constant 0 : i32
    return %c0_i32, %c0_i32_0 : i32, i32
  }
  func.func @transform_5(%arg0: i32) -> (i32, i32) {
    %c0_i32 = arith.constant 0 : i32
    %c0_i32_0 = arith.constant 0 : i32
    return %arg0, %c0_i32 : i32, i32
  }
}

module attributes {stable_mosaic.version = 11 : i64} {
  func.func @mlp_kernel_resident(%arg0: i32, %arg1: memref<256x128xf32, #tpu.memory_space<vmem>>, %arg2: memref<128x128xf32, #tpu.memory_space<vmem>>, %arg3: memref<1x128xf32, #tpu.memory_space<vmem>>, %arg4: memref<128x128xf32, #tpu.memory_space<vmem>>, %arg5: memref<1x128xf32, #tpu.memory_space<vmem>>, %arg6: memref<256x128xf32, #tpu.memory_space<vmem>>) attributes {dimension_semantics = [#tpu.dimension_semantics<parallel>], iteration_bounds = array<i64: 1>, scalar_prefetch = 0 : i64, scratch_operands = 0 : i64, tpu.core_type = #tpu.core_type<tc>, window_params = [{transform_indices = @transform_0, window_bounds = array<i64: 256, 128>}, {pipeline_mode = #tpu.pipeline_mode<synchronous>, transform_indices = @transform_1, window_bounds = array<i64: 128, 128>}, {pipeline_mode = #tpu.pipeline_mode<synchronous>, transform_indices = @transform_2, window_bounds = array<i64: 1, 128>}, {pipeline_mode = #tpu.pipeline_mode<synchronous>, transform_indices = @transform_3, window_bounds = array<i64: 128, 128>}, {pipeline_mode = #tpu.pipeline_mode<synchronous>, transform_indices = @transform_4, window_bounds = array<i64: 1, 128>}, {transform_indices = @transform_5, window_bounds = array<i64: 256, 128>}]} {
    %c0 = arith.constant 0 : index
    %c0_0 = arith.constant 0 : index
    %0 = vector.load %arg1[%c0, %c0_0] : memref<256x128xf32, #tpu.memory_space<vmem>>, vector<256x128xf32>
    %c0_1 = arith.constant 0 : index
    %c0_2 = arith.constant 0 : index
    %1 = vector.load %arg2[%c0_1, %c0_2] : memref<128x128xf32, #tpu.memory_space<vmem>>, vector<128x128xf32>
    %cst = arith.constant dense<0.000000e+00> : vector<256x128xf32>
    %2 = tpu.matmul %0, %1, %cst {dimension_numbers = #tpu.dot_dimension_numbers<[1], [0], [0], [1], [0, 0, 1, 1], [], []>} : vector<256x128xf32>, vector<128x128xf32>, vector<256x128xf32> -> vector<256x128xf32>
    %c0_3 = arith.constant 0 : index
    %c0_4 = arith.constant 0 : index
    %3 = vector.load %arg3[%c0_3, %c0_4] : memref<1x128xf32, #tpu.memory_space<vmem>>, vector<1x128xf32>
    %4 = vector.broadcast %3 : vector<1x128xf32> to vector<256x128xf32>
    %5 = arith.addf %2, %4 : vector<256x128xf32>
    %cst_5 = arith.constant 0.000000e+00 : f32
    %6 = vector.broadcast %cst_5 : f32 to vector<256x128xf32>
    %7 = arith.maximumf %5, %6 : vector<256x128xf32>
    %c0_6 = arith.constant 0 : index
    %c0_7 = arith.constant 0 : index
    %8 = vector.load %arg4[%c0_6, %c0_7] : memref<128x128xf32, #tpu.memory_space<vmem>>, vector<128x128xf32>
    %cst_8 = arith.constant dense<0.000000e+00> : vector<256x128xf32>
    %9 = tpu.matmul %7, %8, %cst_8 {dimension_numbers = #tpu.dot_dimension_numbers<[1], [0], [0], [1], [0, 0, 1, 1], [], []>} : vector<256x128xf32>, vector<128x128xf32>, vector<256x128xf32> -> vector<256x128xf32>
    %c0_9 = arith.constant 0 : index
    %c0_10 = arith.constant 0 : index
    %10 = vector.load %arg5[%c0_9, %c0_10] : memref<1x128xf32, #tpu.memory_space<vmem>>, vector<1x128xf32>
    %11 = vector.broadcast %10 : vector<1x128xf32> to vector<256x128xf32>
    %12 = arith.addf %9, %11 : vector<256x128xf32>
    %c0_11 = arith.constant 0 : index
    %c0_12 = arith.constant 0 : index
    %13 = vector.load %arg6[%c0_11, %c0_12] : memref<256x128xf32, #tpu.memory_space<vmem>>, vector<256x128xf32>
    tpu.vector_store %arg6[%c0_11, %c0_12], %12 {strides = array<i32>} : memref<256x128xf32, #tpu.memory_space<vmem>>, vector<256x128xf32>,
    return
  }
  func.func @transform_0(%arg0: i32) -> (i32, i32) {
    %c0_i32 = arith.constant 0 : i32
    %c0_i32_0 = arith.constant 0 : i32
    return %arg0, %c0_i32 : i32, i32
  }
  func.func @transform_1(%arg0: i32) -> (i32, i32) {
    %c0_i32 = arith.constant 0 : i32
    %c0_i32_0 = arith.constant 0 : i32
    %c0_i32_1 = arith.constant 0 : i32
    return %c0_i32, %c0_i32_0 : i32, i32
  }
  func.func @transform_2(%arg0: i32) -> (i32, i32) {
    %c0_i32 = arith.constant 0 : i32
    %c0_i32_0 = arith.constant 0 : i32
    %c0_i32_1 = arith.constant 0 : i32
    return %c0_i32, %c0_i32_0 : i32, i32
  }
  func.func @transform_3(%arg0: i32) -> (i32, i32) {
    %c0_i32 = arith.constant 0 : i32
    %c0_i32_0 = arith.constant 0 : i32
    %c0_i32_1 = arith.constant 0 : i32
    return %c0_i32, %c0_i32_0 : i32, i32
  }
  func.func @transform_4(%arg0: i32) -> (i32, i32) {
    %c0_i32 = arith.constant 0 : i32
    %c0_i32_0 = arith.constant 0 : i32
    %c0_i32_1 = arith.constant 0 : i32
    return %c0_i32, %c0_i32_0 : i32, i32
  }
  func.func @transform_5(%arg0: i32) -> (i32, i32) {
    %c0_i32 = arith.constant 0 : i32
    %c0_i32_0 = arith.constant 0 : i32
    return %arg0, %c0_i32 : i32, i32
  }
}

</mosaic_0001>

<llo_original>
// kernel: tpu_custom_call.1
$region0: #{tpu_custom_call.1}
  #allocation0 [shape = 'u32[]', space=smem, size = 0x4, offset = 0x4, fixed_abs, tag = 'smem constant byte address 0x4 - core index']
  #allocation1 [shape = 'u32[72,128]{1,0:T(1,128)}', space=vmem, size = 0x9000, scoped, tag = 'internal scratch']
  %s0 = inlined_call_operand.hbm [shape: f32[256,128], index: 0, kind: input, shape index: {}]
  %s1 = inlined_call_operand.hbm [shape: f32[128,128], index: 1, kind: input, shape index: {}]
  %s2 = inlined_call_operand.vmem [shape: f32[1,128], index: 2, kind: input, shape index: {}]
  %s3 = inlined_call_operand.hbm [shape: f32[128,128], index: 3, kind: input, shape index: {}]
  %s4 = inlined_call_operand.vmem [shape: f32[1,128], index: 4, kind: input, shape index: {}]
  %s5 = inlined_call_operand.hbm [shape: f32[256,128], index: 5, kind: output, shape index: {}]
  %s6 = sld [smem:[#allocation0]]
  $region42: #{tpu_custom_call.1} parent=0
    _
  %s8 = ssub.s32 1, %s6
  %s9 = scalar_select 0, %s8, %s6
  $region1: #{tpu_custom_call.1} parent=0
    #allocation2 [shape = 'u8[131072]{0}', space=vmem, size = 0x20000, scoped, tag = 'input window, operand 0, single buffered']
    #allocation3 [shape = 's32[1]{0}', space=sflag, size = 0x4, scoped, tag = 'scoped memory for tpu_custom_call.1']
    #allocation4 [shape = 's32[1]{0}', space=sflag, size = 0x4, scoped, tag = 'scoped memory for tpu_custom_call.1']
    #allocation5 [shape = 'u8[65536]{0}', space=vmem, size = 0x10000, scoped, tag = 'input window, operand 1, single buffered']
    #allocation6 [shape = 's32[1]{0}', space=sflag, size = 0x4, scoped, tag = 'scoped memory for tpu_custom_call.1']
    #allocation7 [shape = 'u8[65536]{0}', space=vmem, size = 0x10000, scoped, tag = 'input window, operand 3, single buffered']
    #allocation8 [shape = 'u8[131072]{0}', space=vmem, size = 0x20000, scoped, tag = 'output window, operand 0, single buffered']
    %10 = vsyncpa [#allocation3], 0
    %11 = vsyncpa [#allocation6], 0
    %12 = vsyncpa [#allocation4], 0
    // Predicated region
    $region2: #{tpu_custom_call.1} parent=1 // pred_check
      _
    $region3: #{tpu_custom_call.1} parent=1 // pred_check_branch
      %14 = sbr.rel (0) target = $region5
    $region4: #{tpu_custom_call.1} parent=1 // pred_region
      %16 = vsyncadd [#allocation3], 0
      %s17 = sshll.u32 %s0, 4
      %s18 = int_to_ptr.hbm [resolvable:$true] %s17
      %s19 = sshll.u32 [#allocation2], 4
      %s20 = int_to_ptr.vmem [resolvable:$true] %s19
      %25 = dma.hbm_to_vmem [thread:$0]  %s18, 4096, %s20, [#allocation3], 128, 128, 8
    $region5: #{tpu_custom_call.1} parent=1 // pred_fallthru
      _
    // Predicated region
    $region6: #{tpu_custom_call.1} parent=1 // pred_check
      _
    $region7: #{tpu_custom_call.1} parent=1 // pred_check_branch
      %27 = sbr.rel (0) target = $region9
    $region8: #{tpu_custom_call.1} parent=1 // pred_region
      %29 = vsyncadd [#allocation6], 0
      %s30 = sshll.u32 %s1, 4
      %s31 = int_to_ptr.hbm [resolvable:$true] %s30
      %s32 = sshll.u32 [#allocation5], 4
      %s33 = int_to_ptr.vmem [resolvable:$true] %s32
      %38 = dma.hbm_to_vmem [thread:$0]  %s31, 2048, %s33, [#allocation6], 128, 128, 8
    $region9: #{tpu_custom_call.1} parent=1 // pred_fallthru
      _
    // Predicated region
    $region10: #{tpu_custom_call.1} parent=1 // pred_check
      _
    $region11: #{tpu_custom_call.1} parent=1 // pred_check_branch
      %40 = sbr.rel (0) target = $region13
    $region12: #{tpu_custom_call.1} parent=1 // pred_region
      _
    $region13: #{tpu_custom_call.1} parent=1 // pred_fallthru
      _
    // Predicated region
    $region14: #{tpu_custom_call.1} parent=1 // pred_check
      _
    $region15: #{tpu_custom_call.1} parent=1 // pred_check_branch
      %42 = sbr.rel (0) target = $region17
    $region16: #{tpu_custom_call.1} parent=1 // pred_region
      %44 = vsyncadd [#allocation6], 0
      %s45 = sshll.u32 %s3, 4
      %s46 = int_to_ptr.hbm [resolvable:$true] %s45
      %s47 = sshll.u32 [#allocation7], 4
      %s48 = int_to_ptr.vmem [resolvable:$true] %s47
      %53 = dma.hbm_to_vmem [thread:$0]  %s46, 2048, %s48, [#allocation6], 128, 128, 8
    $region17: #{tpu_custom_call.1} parent=1 // pred_fallthru
      _
    // Predicated region
    $region18: #{tpu_custom_call.1} parent=1 // pred_check
      _
    $region19: #{tpu_custom_call.1} parent=1 // pred_check_branch
      %55 = sbr.rel (0) target = $region21
    $region20: #{tpu_custom_call.1} parent=1 // pred_region
      _
    $region21: #{tpu_custom_call.1} parent=1 // pred_fallthru
      _
    // Predicated region
    $region22: #{tpu_custom_call.1} parent=1 // pred_check
      _
    $region23: #{tpu_custom_call.1} parent=1 // pred_check_branch
      %57 = sbr.rel (0) target = $region25
    $region24: #{tpu_custom_call.1} parent=1 // pred_region
      %59 = dma.done [#allocation3], 4096
    $region25: #{tpu_custom_call.1} parent=1 // pred_fallthru
      _
    // Predicated region
    $region26: #{tpu_custom_call.1} parent=1 // pred_check
      _
    $region27: #{tpu_custom_call.1} parent=1 // pred_check_branch
      %61 = sbr.rel (0) target = $region29
    $region28: #{tpu_custom_call.1} parent=1 // pred_region
      %63 = dma.done [#allocation6], 2048
    $region29: #{tpu_custom_call.1} parent=1 // pred_fallthru
      _
    // Predicated region
    $region30: #{tpu_custom_call.1} parent=1 // pred_check
      _
    $region31: #{tpu_custom_call.1} parent=1 // pred_check_branch
      %65 = sbr.rel (0) target = $region33
    $region32: #{tpu_custom_call.1} parent=1 // pred_region
      %67 = dma.done [#allocation6], 2048
    $region33: #{tpu_custom_call.1} parent=1 // pred_fallthru
      _
    %v68 = vld [vmem:[#allocation2] sm:$0xff]
    %v69 = vld [vmem:[#allocation2 + $0x8] sm:$0xff]
    %v70 = vld [vmem:[#allocation2 + $0x10] sm:$0xff]
    %v71 = vld [vmem:[#allocation2 + $0x18] sm:$0xff]
    %v72 = vld [vmem:[#allocation2 + $0x20] sm:$0xff]
    %v73 = vld [vmem:[#allocation2 + $0x28] sm:$0xff]
    %v74 = vld [vmem:[#allocation2 + $0x30] sm:$0xff]
    %v75 = vld [vmem:[#allocation2 + $0x38] sm:$0xff]
    %v76 = vld [vmem:[#allocation2 + $0x40] sm:$0xff]
    %v77 = vld [vmem:[#allocation2 + $0x48] sm:$0xff]
    %v78 = vld [vmem:[#allocation2 + $0x50] sm:$0xff]
    %v79 = vld [vmem:[#allocation2 + $0x58] sm:$0xff]
    %v80 = vld [vmem:[#allocation2 + $0x60] sm:$0xff]
    %v81 = vld [vmem:[#allocation2 + $0x68] sm:$0xff]
    %v82 = vld [vmem:[#allocation2 + $0x70] sm:$0xff]
    %v83 = vld [vmem:[#allocation2 + $0x78] sm:$0xff]
    %v84 = vld [vmem:[#allocation2 + $0x80] sm:$0xff]
    %v85 = vld [vmem:[#allocation2 + $0x88] sm:$0xff]
    %v86 = vld [vmem:[#allocation2 + $0x90] sm:$0xff]
    %v87 = vld [vmem:[#allocation2 + $0x98] sm:$0xff]
    %v88 = vld [vmem:[#allocation2 + $0xa0] sm:$0xff]
    %v89 = vld [vmem:[#allocation2 + $0xa8] sm:$0xff]
    %v90 = vld [vmem:[#allocation2 + $0xb0] sm:$0xff]
    %v91 = vld [vmem:[#allocation2 + $0xb8] sm:$0xff]
    %v92 = vld [vmem:[#allocation2 + $0xc0] sm:$0xff]
    %v93 = vld [vmem:[#allocation2 + $0xc8] sm:$0xff]
    %v94 = vld [vmem:[#allocation2 + $0xd0] sm:$0xff]
    %v95 = vld [vmem:[#allocation2 + $0xd8] sm:$0xff]
    %v96 = vld [vmem:[#allocation2 + $0xe0] sm:$0xff]
    %v97 = vld [vmem:[#allocation2 + $0xe8] sm:$0xff]
    %v98 = vld [vmem:[#allocation2 + $0xf0] sm:$0xff]
    %v99 = vld [vmem:[#allocation2 + $0xf8] sm:$0xff]
    %v100 = vld [vmem:[#allocation5] sm:$0xff]
    %v101 = vld [vmem:[#allocation5 + $0x8] sm:$0xff]
    %v102 = vld [vmem:[#allocation5 + $0x10] sm:$0xff]
    %v103 = vld [vmem:[#allocation5 + $0x18] sm:$0xff]
    %v104 = vld [vmem:[#allocation5 + $0x20] sm:$0xff]
    %v105 = vld [vmem:[#allocation5 + $0x28] sm:$0xff]
    %v106 = vld [vmem:[#allocation5 + $0x30] sm:$0xff]
    %v107 = vld [vmem:[#allocation5 + $0x38] sm:$0xff]
    %v108 = vld [vmem:[#allocation5 + $0x40] sm:$0xff]
    %v109 = vld [vmem:[#allocation5 + $0x48] sm:$0xff]
    %v110 = vld [vmem:[#allocation5 + $0x50] sm:$0xff]
    %v111 = vld [vmem:[#allocation5 + $0x58] sm:$0xff]
    %v112 = vld [vmem:[#allocation5 + $0x60] sm:$0xff]
    %v113 = vld [vmem:[#allocation5 + $0x68] sm:$0xff]
    %v114 = vld [vmem:[#allocation5 + $0x70] sm:$0xff]
    %v115 = vld [vmem:[#allocation5 + $0x78] sm:$0xff]
    %v116 = vld [vmem:[%s2] sm:$0x1]
    %v118 = vperm.slane %v116, 0
    %120 = vmatpush.msra.mxu0 %v115
    %121 = vmatpush.msra.mxu0 %v114
    %122 = vmatpush.msra.mxu0 %v113
    %123 = vmatpush.msra.mxu0 %v112
    %124 = vmatpush.msra.mxu0 %v111
    %125 = vmatpush.msra.mxu0 %v110
    %126 = vmatpush.msra.mxu0 %v109
    %127 = vmatpush.msra.mxu0 %v108
    %128 = vmatpush.msra.mxu0 %v107
    %129 = vmatpush.msra.mxu0 %v106
    %130 = vmatpush.msra.mxu0 %v105
    %131 = vmatpush.msra.mxu0 %v104
    %132 = vmatpush.msra.mxu0 %v103
    %133 = vmatpush.msra.mxu0 %v102
    %134 = vmatpush.msra.mxu0 %v101
    %135 = vmatpush.msra.mxu0 %v100
    %136 = vmatmul.f32.gmra.mxu0 %v68
    %v137 = vpop.f32.mrf.mxu0
    %v138 = vadd.f32 %v118, %v137
    %139 = vmatmul.f32.gmra.mxu0 %v69
    %v140 = vpop.f32.mrf.mxu0
    %v141 = vadd.f32 %v118, %v140
    %142 = vmatmul.f32.gmra.mxu0 %v70
    %v143 = vpop.f32.mrf.mxu0
    %v144 = vadd.f32 %v118, %v143
    %145 = vmatmul.f32.gmra.mxu0 %v71
    %v146 = vpop.f32.mrf.mxu0
    %v147 = vadd.f32 %v118, %v146
    %148 = vmatmul.f32.gmra.mxu0 %v72
    %v149 = vpop.f32.mrf.mxu0
    %v150 = vadd.f32 %v118, %v149
    %151 = vmatmul.f32.gmra.mxu0 %v73
    %v152 = vpop.f32.mrf.mxu0
    %v153 = vadd.f32 %v118, %v152
    %154 = vmatmul.f32.gmra.mxu0 %v74
    %v155 = vpop.f32.mrf.mxu0
    %v156 = vadd.f32 %v118, %v155
    %157 = vmatmul.f32.gmra.mxu0 %v75
    %v158 = vpop.f32.mrf.mxu0
    %v159 = vadd.f32 %v118, %v158
    %160 = vmatmul.f32.gmra.mxu0 %v76
    %v161 = vpop.f32.mrf.mxu0
    %v162 = vadd.f32 %v118, %v161
    %163 = vmatmul.f32.gmra.mxu0 %v77
    %v164 = vpop.f32.mrf.mxu0
    %v165 = vadd.f32 %v118, %v164
    %166 = vmatmul.f32.gmra.mxu0 %v78
    %v167 = vpop.f32.mrf.mxu0
    %v168 = vadd.f32 %v118, %v167
    %169 = vmatmul.f32.gmra.mxu0 %v79
    %v170 = vpop.f32.mrf.mxu0
    %v171 = vadd.f32 %v118, %v170
    %172 = vmatmul.f32.gmra.mxu0 %v80
    %v173 = vpop.f32.mrf.mxu0
    %v174 = vadd.f32 %v118, %v173
    %175 = vmatmul.f32.gmra.mxu0 %v81
    %v176 = vpop.f32.mrf.mxu0
    %v177 = vadd.f32 %v118, %v176
    %178 = vmatmul.f32.gmra.mxu0 %v82
    %v179 = vpop.f32.mrf.mxu0
    %v180 = vadd.f32 %v118, %v179
    %181 = vmatmul.f32.gmra.mxu0 %v83
    %v182 = vpop.f32.mrf.mxu0
    %v183 = vadd.f32 %v118, %v182
    %184 = vmatmul.f32.gmra.mxu0 %v84
    %v185 = vpop.f32.mrf.mxu0
    %v186 = vadd.f32 %v118, %v185
    %187 = vmatmul.f32.gmra.mxu0 %v85
    %v188 = vpop.f32.mrf.mxu0
    %v189 = vadd.f32 %v118, %v188
    %190 = vmatmul.f32.gmra.mxu0 %v86
    %v191 = vpop.f32.mrf.mxu0
    %v192 = vadd.f32 %v118, %v191
    %193 = vmatmul.f32.gmra.mxu0 %v87
    %v194 = vpop.f32.mrf.mxu0
    %v195 = vadd.f32 %v118, %v194
    %196 = vmatmul.f32.gmra.mxu0 %v88
    %v197 = vpop.f32.mrf.mxu0
    %v198 = vadd.f32 %v118, %v197
    %199 = vmatmul.f32.gmra.mxu0 %v89
    %v200 = vpop.f32.mrf.mxu0
    %v201 = vadd.f32 %v118, %v200
    %202 = vmatmul.f32.gmra.mxu0 %v90
    %v203 = vpop.f32.mrf.mxu0
    %v204 = vadd.f32 %v118, %v203
    %205 = vmatmul.f32.gmra.mxu0 %v91
    %v206 = vpop.f32.mrf.mxu0
    %v207 = vadd.f32 %v118, %v206
    %208 = vmatmul.f32.gmra.mxu0 %v92
    %v209 = vpop.f32.mrf.mxu0
    %v210 = vadd.f32 %v118, %v209
    %211 = vmatmul.f32.gmra.mxu0 %v93
    %v212 = vpop.f32.mrf.mxu0
    %v213 = vadd.f32 %v118, %v212
    %214 = vmatmul.f32.gmra.mxu0 %v94
    %v215 = vpop.f32.mrf.mxu0
    %v216 = vadd.f32 %v118, %v215
    %217 = vmatmul.f32.gmra.mxu0 %v95
    %v218 = vpop.f32.mrf.mxu0
    %v219 = vadd.f32 %v118, %v218
    %220 = vmatmul.f32.gmra.mxu0 %v96
    %v221 = vpop.f32.mrf.mxu0
    %v222 = vadd.f32 %v118, %v221
    %223 = vmatmul.f32.gmra.mxu0 %v97
    %v224 = vpop.f32.mrf.mxu0
    %v225 = vadd.f32 %v118, %v224
    %226 = vmatmul.f32.gmra.mxu0 %v98
    %v227 = vpop.f32.mrf.mxu0
    %v228 = vadd.f32 %v118, %v227
    %229 = vmatmul.f32.gmra.mxu0 %v99
    %v230 = vpop.f32.mrf.mxu0
    %v231 = vadd.f32 %v118, %v230
    %232 = vdwg.mxu0
    %v233 = vmax.f32 %v138, 0.0
    %v234 = vmax.f32 %v141, 0.0
    %v235 = vmax.f32 %v144, 0.0
    %v236 = vmax.f32 %v147, 0.0
    %v237 = vmax.f32 %v150, 0.0
    %v238 = vmax.f32 %v153, 0.0
    %v239 = vmax.f32 %v156, 0.0
    %v240 = vmax.f32 %v159, 0.0
    %v241 = vmax.f32 %v162, 0.0
    %v242 = vmax.f32 %v165, 0.0
    %v243 = vmax.f32 %v168, 0.0
    %v244 = vmax.f32 %v171, 0.0
    %v245 = vmax.f32 %v174, 0.0
    %v246 = vmax.f32 %v177, 0.0
    %v247 = vmax.f32 %v180, 0.0
    %v248 = vmax.f32 %v183, 0.0
    %v249 = vmax.f32 %v186, 0.0
    %v250 = vmax.f32 %v189, 0.0
    %v251 = vmax.f32 %v192, 0.0
    %v252 = vmax.f32 %v195, 0.0
    %v253 = vmax.f32 %v198, 0.0
    %v254 = vmax.f32 %v201, 0.0
    %v255 = vmax.f32 %v204, 0.0
    %v256 = vmax.f32 %v207, 0.0
    %v257 = vmax.f32 %v210, 0.0
    %v258 = vmax.f32 %v213, 0.0
    %v259 = vmax.f32 %v216, 0.0
    %v260 = vmax.f32 %v219, 0.0
    %v261 = vmax.f32 %v222, 0.0
    %v262 = vmax.f32 %v225, 0.0
    %v263 = vmax.f32 %v228, 0.0
    %v264 = vmax.f32 %v231, 0.0
    %v265 = vld [vmem:[#allocation7] sm:$0xff]
    %v266 = vld [vmem:[#allocation7 + $0x8] sm:$0xff]
    %v267 = vld [vmem:[#allocation7 + $0x10] sm:$0xff]
    %v268 = vld [vmem:[#allocation7 + $0x18] sm:$0xff]
    %v269 = vld [vmem:[#allocation7 + $0x20] sm:$0xff]
    %v270 = vld [vmem:[#allocation7 + $0x28] sm:$0xff]
    %v271 = vld [vmem:[#allocation7 + $0x30] sm:$0xff]
    %v272 = vld [vmem:[#allocation7 + $0x38] sm:$0xff]
    %v273 = vld [vmem:[#allocation7 + $0x40] sm:$0xff]
    %v274 = vld [vmem:[#allocation7 + $0x48] sm:$0xff]
    %v275 = vld [vmem:[#allocation7 + $0x50] sm:$0xff]
    %v276 = vld [vmem:[#allocation7 + $0x58] sm:$0xff]
    %v277 = vld [vmem:[#allocation7 + $0x60] sm:$0xff]
    %v278 = vld [vmem:[#allocation7 + $0x68] sm:$0xff]
    %v279 = vld [vmem:[#allocation7 + $0x70] sm:$0xff]
    %v280 = vld [vmem:[#allocation7 + $0x78] sm:$0xff]
    %v281 = vld [vmem:[%s4] sm:$0x1]
    %v283 = vperm.slane %v281, 0
    %285 = vmatpush.msra.mxu0 %v280
    %286 = vmatpush.msra.mxu0 %v279
    %287 = vmatpush.msra.mxu0 %v278
    %288 = vmatpush.msra.mxu0 %v277
    %289 = vmatpush.msra.mxu0 %v276
    %290 = vmatpush.msra.mxu0 %v275
    %291 = vmatpush.msra.mxu0 %v274
    %292 = vmatpush.msra.mxu0 %v273
    %293 = vmatpush.msra.mxu0 %v272
    %294 = vmatpush.msra.mxu0 %v271
    %295 = vmatpush.msra.mxu0 %v270
    %296 = vmatpush.msra.mxu0 %v269
    %297 = vmatpush.msra.mxu0 %v268
    %298 = vmatpush.msra.mxu0 %v267
    %299 = vmatpush.msra.mxu0 %v266
    %300 = vmatpush.msra.mxu0 %v265
    %301 = vmatmul.f32.gmra.mxu0 %v233
    %v302 = vpop.f32.mrf.mxu0
    %v303 = vadd.f32 %v283, %v302
    %304 = vmatmul.f32.gmra.mxu0 %v234
    %v305 = vpop.f32.mrf.mxu0
    %v306 = vadd.f32 %v283, %v305
    %307 = vmatmul.f32.gmra.mxu0 %v235
    %v308 = vpop.f32.mrf.mxu0
    %v309 = vadd.f32 %v283, %v308
    %310 = vmatmul.f32.gmra.mxu0 %v236
    %v311 = vpop.f32.mrf.mxu0
    %v312 = vadd.f32 %v283, %v311
    %313 = vmatmul.f32.gmra.mxu0 %v237
    %v314 = vpop.f32.mrf.mxu0
    %v315 = vadd.f32 %v283, %v314
    %316 = vmatmul.f32.gmra.mxu0 %v238
    %v317 = vpop.f32.mrf.mxu0
    %v318 = vadd.f32 %v283, %v317
    %319 = vmatmul.f32.gmra.mxu0 %v239
    %v320 = vpop.f32.mrf.mxu0
    %v321 = vadd.f32 %v283, %v320
    %322 = vmatmul.f32.gmra.mxu0 %v240
    %v323 = vpop.f32.mrf.mxu0
    %v324 = vadd.f32 %v283, %v323
    %325 = vmatmul.f32.gmra.mxu0 %v241
    %v326 = vpop.f32.mrf.mxu0
    %v327 = vadd.f32 %v283, %v326
    %328 = vmatmul.f32.gmra.mxu0 %v242
    %v329 = vpop.f32.mrf.mxu0
    %v330 = vadd.f32 %v283, %v329
    %331 = vmatmul.f32.gmra.mxu0 %v243
    %v332 = vpop.f32.mrf.mxu0
    %v333 = vadd.f32 %v283, %v332
    %334 = vmatmul.f32.gmra.mxu0 %v244
    %v335 = vpop.f32.mrf.mxu0
    %v336 = vadd.f32 %v283, %v335
    %337 = vmatmul.f32.gmra.mxu0 %v245
    %v338 = vpop.f32.mrf.mxu0
    %v339 = vadd.f32 %v283, %v338
    %340 = vmatmul.f32.gmra.mxu0 %v246
    %v341 = vpop.f32.mrf.mxu0
    %v342 = vadd.f32 %v283, %v341
    %343 = vmatmul.f32.gmra.mxu0 %v247
    %v344 = vpop.f32.mrf.mxu0
    %v345 = vadd.f32 %v283, %v344
    %346 = vmatmul.f32.gmra.mxu0 %v248
    %v347 = vpop.f32.mrf.mxu0
    %v348 = vadd.f32 %v283, %v347
    %349 = vmatmul.f32.gmra.mxu0 %v249
    %v350 = vpop.f32.mrf.mxu0
    %v351 = vadd.f32 %v283, %v350
    %352 = vmatmul.f32.gmra.mxu0 %v250
    %v353 = vpop.f32.mrf.mxu0
    %v354 = vadd.f32 %v283, %v353
    %355 = vmatmul.f32.gmra.mxu0 %v251
    %v356 = vpop.f32.mrf.mxu0
    %v357 = vadd.f32 %v283, %v356
    %358 = vmatmul.f32.gmra.mxu0 %v252
    %v359 = vpop.f32.mrf.mxu0
    %v360 = vadd.f32 %v283, %v359
    %361 = vmatmul.f32.gmra.mxu0 %v253
    %v362 = vpop.f32.mrf.mxu0
    %v363 = vadd.f32 %v283, %v362
    %364 = vmatmul.f32.gmra.mxu0 %v254
    %v365 = vpop.f32.mrf.mxu0
    %v366 = vadd.f32 %v283, %v365
    %367 = vmatmul.f32.gmra.mxu0 %v255
    %v368 = vpop.f32.mrf.mxu0
    %v369 = vadd.f32 %v283, %v368
    %370 = vmatmul.f32.gmra.mxu0 %v256
    %v371 = vpop.f32.mrf.mxu0
    %v372 = vadd.f32 %v283, %v371
    %373 = vmatmul.f32.gmra.mxu0 %v257
    %v374 = vpop.f32.mrf.mxu0
    %v375 = vadd.f32 %v283, %v374
    %376 = vmatmul.f32.gmra.mxu0 %v258
    %v377 = vpop.f32.mrf.mxu0
    %v378 = vadd.f32 %v283, %v377
    %379 = vmatmul.f32.gmra.mxu0 %v259
    %v380 = vpop.f32.mrf.mxu0
    %v381 = vadd.f32 %v283, %v380
    %382 = vmatmul.f32.gmra.mxu0 %v260
    %v383 = vpop.f32.mrf.mxu0
    %v384 = vadd.f32 %v283, %v383
    %385 = vmatmul.f32.gmra.mxu0 %v261
    %v386 = vpop.f32.mrf.mxu0
    %v387 = vadd.f32 %v283, %v386
    %388 = vmatmul.f32.gmra.mxu0 %v262
    %v389 = vpop.f32.mrf.mxu0
    %v390 = vadd.f32 %v283, %v389
    %391 = vmatmul.f32.gmra.mxu0 %v263
    %v392 = vpop.f32.mrf.mxu0
    %v393 = vadd.f32 %v283, %v392
    %394 = vmatmul.f32.gmra.mxu0 %v264
    %v395 = vpop.f32.mrf.mxu0
    %v396 = vadd.f32 %v283, %v395
    %397 = vdwg.mxu0
    %398 = vst [vmem:[#allocation8] sm:$0xff] %v303
    %399 = vst [vmem:[#allocation8 + $0x8] sm:$0xff] %v306
    %400 = vst [vmem:[#allocation8 + $0x10] sm:$0xff] %v309
    %401 = vst [vmem:[#allocation8 + $0x18] sm:$0xff] %v312
    %402 = vst [vmem:[#allocation8 + $0x20] sm:$0xff] %v315
    %403 = vst [vmem:[#allocation8 + $0x28] sm:$0xff] %v318
    %404 = vst [vmem:[#allocation8 + $0x30] sm:$0xff] %v321
    %405 = vst [vmem:[#allocation8 + $0x38] sm:$0xff] %v324
    %406 = vst [vmem:[#allocation8 + $0x40] sm:$0xff] %v327
    %407 = vst [vmem:[#allocation8 + $0x48] sm:$0xff] %v330
    %408 = vst [vmem:[#allocation8 + $0x50] sm:$0xff] %v333
    %409 = vst [vmem:[#allocation8 + $0x58] sm:$0xff] %v336
    %410 = vst [vmem:[#allocation8 + $0x60] sm:$0xff] %v339
    %411 = vst [vmem:[#allocation8 + $0x68] sm:$0xff] %v342
    %412 = vst [vmem:[#allocation8 + $0x70] sm:$0xff] %v345
    %413 = vst [vmem:[#allocation8 + $0x78] sm:$0xff] %v348
    %414 = vst [vmem:[#allocation8 + $0x80] sm:$0xff] %v351
    %415 = vst [vmem:[#allocation8 + $0x88] sm:$0xff] %v354
    %416 = vst [vmem:[#allocation8 + $0x90] sm:$0xff] %v357
    %417 = vst [vmem:[#allocation8 + $0x98] sm:$0xff] %v360
    %418 = vst [vmem:[#allocation8 + $0xa0] sm:$0xff] %v363
    %419 = vst [vmem:[#allocation8 + $0xa8] sm:$0xff] %v366
    %420 = vst [vmem:[#allocation8 + $0xb0] sm:$0xff] %v369
    %421 = vst [vmem:[#allocation8 + $0xb8] sm:$0xff] %v372
    %422 = vst [vmem:[#allocation8 + $0xc0] sm:$0xff] %v375
    %423 = vst [vmem:[#allocation8 + $0xc8] sm:$0xff] %v378
    %424 = vst [vmem:[#allocation8 + $0xd0] sm:$0xff] %v381
    %425 = vst [vmem:[#allocation8 + $0xd8] sm:$0xff] %v384
    %426 = vst [vmem:[#allocation8 + $0xe0] sm:$0xff] %v387
    %427 = vst [vmem:[#allocation8 + $0xe8] sm:$0xff] %v390
    %428 = vst [vmem:[#allocation8 + $0xf0] sm:$0xff] %v393
    %429 = vst [vmem:[#allocation8 + $0xf8] sm:$0xff] %v396
    // Predicated region
    $region34: #{tpu_custom_call.1} parent=1 // pred_check
      _
    $region35: #{tpu_custom_call.1} parent=1 // pred_check_branch
      %431 = sbr.rel (0) target = $region37
    $region36: #{tpu_custom_call.1} parent=1 // pred_region
      %433 = vsyncadd [#allocation4], 0
      %s434 = sshll.u32 [#allocation8], 4
      %s435 = int_to_ptr.vmem [resolvable:$true] %s434
      %s436 = sshll.u32 %s5, 4
      %s437 = int_to_ptr.hbm [resolvable:$true] %s436
      %442 = dma.vmem_to_hbm [thread:$0]  %s435, 4096, %s437, [#allocation4], 128, 128, 8
    $region37: #{tpu_custom_call.1} parent=1 // pred_fallthru
      _
    // Predicated region
    $region38: #{tpu_custom_call.1} parent=1 // pred_check
      _
    $region39: #{tpu_custom_call.1} parent=1 // pred_check_branch
      %444 = sbr.rel (0) target = $region41
    $region40: #{tpu_custom_call.1} parent=1 // pred_region
      %446 = dma.done [#allocation4], 4096
    $region41: #{tpu_custom_call.1} parent=1 // pred_fallthru
      _
    %447 = vsyncpa [#allocation3], 1
    %448 = vsyncpa [#allocation6], 1
    %449 = vsyncpa [#allocation4], 1

// kernel: tpu_custom_call.1
$region0: #{tpu_custom_call.1}
  #allocation0 [shape = 'u32[]', space=smem, size = 0x4, offset = 0x4, fixed_abs, tag = 'smem constant byte address 0x4 - core index']
  #allocation1 [shape = 'u32[72,128]{1,0:T(1,128)}', space=vmem, size = 0x9000, scoped, tag = 'internal scratch']
  %s0 = inlined_call_operand.hbm [shape: f32[256,128], index: 0, kind: input, shape index: {}]
  %s1 = inlined_call_operand.hbm [shape: f32[128,128], index: 1, kind: input, shape index: {}]
  %s2 = inlined_call_operand.vmem [shape: f32[1,128], index: 2, kind: input, shape index: {}]
  %s3 = inlined_call_operand.hbm [shape: f32[128,128], index: 3, kind: input, shape index: {}]
  %s4 = inlined_call_operand.vmem [shape: f32[1,128], index: 4, kind: input, shape index: {}]
  %s5 = inlined_call_operand.hbm [shape: f32[256,128], index: 5, kind: output, shape index: {}]
  %s6 = sld [smem:[#allocation0]]
  $region42: #{tpu_custom_call.1} parent=0
    _
  %s8 = ssub.s32 1, %s6
  %s9 = scalar_select 0, %s8, %s6
  $region1: #{tpu_custom_call.1} parent=0
    #allocation2 [shape = 'u8[131072]{0}', space=vmem, size = 0x20000, scoped, tag = 'input window, operand 0, single buffered']
    #allocation3 [shape = 's32[1]{0}', space=sflag, size = 0x4, scoped, tag = 'scoped memory for tpu_custom_call.1']
    #allocation4 [shape = 's32[1]{0}', space=sflag, size = 0x4, scoped, tag = 'scoped memory for tpu_custom_call.1']
    #allocation5 [shape = 'u8[65536]{0}', space=vmem, size = 0x10000, scoped, tag = 'input window, operand 1, single buffered']
    #allocation6 [shape = 's32[1]{0}', space=sflag, size = 0x4, scoped, tag = 'scoped memory for tpu_custom_call.1']
    #allocation7 [shape = 'u8[65536]{0}', space=vmem, size = 0x10000, scoped, tag = 'input window, operand 3, single buffered']
    #allocation8 [shape = 'u8[131072]{0}', space=vmem, size = 0x20000, scoped, tag = 'output window, operand 0, single buffered']
    %10 = vsyncpa [#allocation3], 0
    %11 = vsyncpa [#allocation6], 0
    %12 = vsyncpa [#allocation4], 0
    // Predicated region
    $region2: #{tpu_custom_call.1} parent=1 // pred_check
      _
    $region3: #{tpu_custom_call.1} parent=1 // pred_check_branch
      %14 = sbr.rel (0) target = $region5
    $region4: #{tpu_custom_call.1} parent=1 // pred_region
      %16 = vsyncadd [#allocation3], 0
      %s17 = sshll.u32 %s0, 4
      %s18 = int_to_ptr.hbm [resolvable:$true] %s17
      %s19 = sshll.u32 [#allocation2], 4
      %s20 = int_to_ptr.vmem [resolvable:$true] %s19
      %25 = dma.hbm_to_vmem [thread:$0]  %s18, 4096, %s20, [#allocation3], 128, 128, 8
    $region5: #{tpu_custom_call.1} parent=1 // pred_fallthru
      _
    // Predicated region
    $region6: #{tpu_custom_call.1} parent=1 // pred_check
      _
    $region7: #{tpu_custom_call.1} parent=1 // pred_check_branch
      %27 = sbr.rel (0) target = $region9
    $region8: #{tpu_custom_call.1} parent=1 // pred_region
      %29 = vsyncadd [#allocation6], 0
      %s30 = sshll.u32 %s1, 4
      %s31 = int_to_ptr.hbm [resolvable:$true] %s30
      %s32 = sshll.u32 [#allocation5], 4
      %s33 = int_to_ptr.vmem [resolvable:$true] %s32
      %38 = dma.hbm_to_vmem [thread:$0]  %s31, 2048, %s33, [#allocation6], 128, 128, 8
    $region9: #{tpu_custom_call.1} parent=1 // pred_fallthru
      _
    // Predicated region
    $region10: #{tpu_custom_call.1} parent=1 // pred_check
      _
    $region11: #{tpu_custom_call.1} parent=1 // pred_check_branch
      %40 = sbr.rel (0) target = $region13
    $region12: #{tpu_custom_call.1} parent=1 // pred_region
      _
    $region13: #{tpu_custom_call.1} parent=1 // pred_fallthru
      _
    // Predicated region
    $region14: #{tpu_custom_call.1} parent=1 // pred_check
      _
    $region15: #{tpu_custom_call.1} parent=1 // pred_check_branch
      %42 = sbr.rel (0) target = $region17
    $region16: #{tpu_custom_call.1} parent=1 // pred_region
      %44 = vsyncadd [#allocation6], 0
      %s45 = sshll.u32 %s3, 4
      %s46 = int_to_ptr.hbm [resolvable:$true] %s45
      %s47 = sshll.u32 [#allocation7], 4
      %s48 = int_to_ptr.vmem [resolvable:$true] %s47
      %53 = dma.hbm_to_vmem [thread:$0]  %s46, 2048, %s48, [#allocation6], 128, 128, 8
    $region17: #{tpu_custom_call.1} parent=1 // pred_fallthru
      _
    // Predicated region
    $region18: #{tpu_custom_call.1} parent=1 // pred_check
      _
    $region19: #{tpu_custom_call.1} parent=1 // pred_check_branch
      %55 = sbr.rel (0) target = $region21
    $region20: #{tpu_custom_call.1} parent=1 // pred_region
      _
    $region21: #{tpu_custom_call.1} parent=1 // pred_fallthru
      _
    // Predicated region
    $region22: #{tpu_custom_call.1} parent=1 // pred_check
      _
    $region23: #{tpu_custom_call.1} parent=1 // pred_check_branch
      %57 = sbr.rel (0) target = $region25
    $region24: #{tpu_custom_call.1} parent=1 // pred_region
      %59 = dma.done [#allocation3], 4096
    $region25: #{tpu_custom_call.1} parent=1 // pred_fallthru
      _
    // Predicated region
    $region26: #{tpu_custom_call.1} parent=1 // pred_check
      _
    $region27: #{tpu_custom_call.1} parent=1 // pred_check_branch
      %61 = sbr.rel (0) target = $region29
    $region28: #{tpu_custom_call.1} parent=1 // pred_region
      %63 = dma.done [#allocation6], 2048
    $region29: #{tpu_custom_call.1} parent=1 // pred_fallthru
      _
    // Predicated region
    $region30: #{tpu_custom_call.1} parent=1 // pred_check
      _
    $region31: #{tpu_custom_call.1} parent=1 // pred_check_branch
      %65 = sbr.rel (0) target = $region33
    $region32: #{tpu_custom_call.1} parent=1 // pred_region
      %67 = dma.done [#allocation6], 2048
    $region33: #{tpu_custom_call.1} parent=1 // pred_fallthru
      _
    %v68 = vld [vmem:[#allocation2] sm:$0xff]
    %v69 = vld [vmem:[#allocation2 + $0x8] sm:$0xff]
    %v70 = vld [vmem:[#allocation2 + $0x10] sm:$0xff]
    %v71 = vld [vmem:[#allocation2 + $0x18] sm:$0xff]
    %v72 = vld [vmem:[#allocation2 + $0x20] sm:$0xff]
    %v73 = vld [vmem:[#allocation2 + $0x28] sm:$0xff]
    %v74 = vld [vmem:[#allocation2 + $0x30] sm:$0xff]
    %v75 = vld [vmem:[#allocation2 + $0x38] sm:$0xff]
    %v76 = vld [vmem:[#allocation2 + $0x40] sm:$0xff]
    %v77 = vld [vmem:[#allocation2 + $0x48] sm:$0xff]
    %v78 = vld [vmem:[#allocation2 + $0x50] sm:$0xff]
    %v79 = vld [vmem:[#allocation2 + $0x58] sm:$0xff]
    %v80 = vld [vmem:[#allocation2 + $0x60] sm:$0xff]
    %v81 = vld [vmem:[#allocation2 + $0x68] sm:$0xff]
    %v82 = vld [vmem:[#allocation2 + $0x70] sm:$0xff]
    %v83 = vld [vmem:[#allocation2 + $0x78] sm:$0xff]
    %v84 = vld [vmem:[#allocation2 + $0x80] sm:$0xff]
    %v85 = vld [vmem:[#allocation2 + $0x88] sm:$0xff]
    %v86 = vld [vmem:[#allocation2 + $0x90] sm:$0xff]
    %v87 = vld [vmem:[#allocation2 + $0x98] sm:$0xff]
    %v88 = vld [vmem:[#allocation2 + $0xa0] sm:$0xff]
    %v89 = vld [vmem:[#allocation2 + $0xa8] sm:$0xff]
    %v90 = vld [vmem:[#allocation2 + $0xb0] sm:$0xff]
    %v91 = vld [vmem:[#allocation2 + $0xb8] sm:$0xff]
    %v92 = vld [vmem:[#allocation2 + $0xc0] sm:$0xff]
    %v93 = vld [vmem:[#allocation2 + $0xc8] sm:$0xff]
    %v94 = vld [vmem:[#allocation2 + $0xd0] sm:$0xff]
    %v95 = vld [vmem:[#allocation2 + $0xd8] sm:$0xff]
    %v96 = vld [vmem:[#allocation2 + $0xe0] sm:$0xff]
    %v97 = vld [vmem:[#allocation2 + $0xe8] sm:$0xff]
    %v98 = vld [vmem:[#allocation2 + $0xf0] sm:$0xff]
    %v99 = vld [vmem:[#allocation2 + $0xf8] sm:$0xff]
    %v100 = vld [vmem:[#allocation5] sm:$0xff]
    %v101 = vld [vmem:[#allocation5 + $0x8] sm:$0xff]
    %v102 = vld [vmem:[#allocation5 + $0x10] sm:$0xff]
    %v103 = vld [vmem:[#allocation5 + $0x18] sm:$0xff]
    %v104 = vld [vmem:[#allocation5 + $0x20] sm:$0xff]
    %v105 = vld [vmem:[#allocation5 + $0x28] sm:$0xff]
    %v106 = vld [vmem:[#allocation5 + $0x30] sm:$0xff]
    %v107 = vld [vmem:[#allocation5 + $0x38] sm:$0xff]
    %v108 = vld [vmem:[#allocation5 + $0x40] sm:$0xff]
    %v109 = vld [vmem:[#allocation5 + $0x48] sm:$0xff]
    %v110 = vld [vmem:[#allocation5 + $0x50] sm:$0xff]
    %v111 = vld [vmem:[#allocation5 + $0x58] sm:$0xff]
    %v112 = vld [vmem:[#allocation5 + $0x60] sm:$0xff]
    %v113 = vld [vmem:[#allocation5 + $0x68] sm:$0xff]
    %v114 = vld [vmem:[#allocation5 + $0x70] sm:$0xff]
    %v115 = vld [vmem:[#allocation5 + $0x78] sm:$0xff]
    %v116 = vld [vmem:[%s2] sm:$0x1]
    %v118 = vperm.slane %v116, 0
    %120 = vmatpush.msra.mxu0 %v115
    %121 = vmatpush.msra.mxu0 %v114
    %122 = vmatpush.msra.mxu0 %v113
    %123 = vmatpush.msra.mxu0 %v112
    %124 = vmatpush.msra.mxu0 %v111
    %125 = vmatpush.msra.mxu0 %v110
    %126 = vmatpush.msra.mxu0 %v109
    %127 = vmatpush.msra.mxu0 %v108
    %128 = vmatpush.msra.mxu0 %v107
    %129 = vmatpush.msra.mxu0 %v106
    %130 = vmatpush.msra.mxu0 %v105
    %131 = vmatpush.msra.mxu0 %v104
    %132 = vmatpush.msra.mxu0 %v103
    %133 = vmatpush.msra.mxu0 %v102
    %134 = vmatpush.msra.mxu0 %v101
    %135 = vmatpush.msra.mxu0 %v100
    %136 = vmatmul.f32.gmra.mxu0 %v68
    %v137 = vpop.f32.mrf.mxu0
    %v138 = vadd.f32 %v118, %v137
    %139 = vmatmul.f32.gmra.mxu0 %v69
    %v140 = vpop.f32.mrf.mxu0
    %v141 = vadd.f32 %v118, %v140
    %142 = vmatmul.f32.gmra.mxu0 %v70
    %v143 = vpop.f32.mrf.mxu0
    %v144 = vadd.f32 %v118, %v143
    %145 = vmatmul.f32.gmra.mxu0 %v71
    %v146 = vpop.f32.mrf.mxu0
    %v147 = vadd.f32 %v118, %v146
    %148 = vmatmul.f32.gmra.mxu0 %v72
    %v149 = vpop.f32.mrf.mxu0
    %v150 = vadd.f32 %v118, %v149
    %151 = vmatmul.f32.gmra.mxu0 %v73
    %v152 = vpop.f32.mrf.mxu0
    %v153 = vadd.f32 %v118, %v152
    %154 = vmatmul.f32.gmra.mxu0 %v74
    %v155 = vpop.f32.mrf.mxu0
    %v156 = vadd.f32 %v118, %v155
    %157 = vmatmul.f32.gmra.mxu0 %v75
    %v158 = vpop.f32.mrf.mxu0
    %v159 = vadd.f32 %v118, %v158
    %160 = vmatmul.f32.gmra.mxu0 %v76
    %v161 = vpop.f32.mrf.mxu0
    %v162 = vadd.f32 %v118, %v161
    %163 = vmatmul.f32.gmra.mxu0 %v77
    %v164 = vpop.f32.mrf.mxu0
    %v165 = vadd.f32 %v118, %v164
    %166 = vmatmul.f32.gmra.mxu0 %v78
    %v167 = vpop.f32.mrf.mxu0
    %v168 = vadd.f32 %v118, %v167
    %169 = vmatmul.f32.gmra.mxu0 %v79
    %v170 = vpop.f32.mrf.mxu0
    %v171 = vadd.f32 %v118, %v170
    %172 = vmatmul.f32.gmra.mxu0 %v80
    %v173 = vpop.f32.mrf.mxu0
    %v174 = vadd.f32 %v118, %v173
    %175 = vmatmul.f32.gmra.mxu0 %v81
    %v176 = vpop.f32.mrf.mxu0
    %v177 = vadd.f32 %v118, %v176
    %178 = vmatmul.f32.gmra.mxu0 %v82
    %v179 = vpop.f32.mrf.mxu0
    %v180 = vadd.f32 %v118, %v179
    %181 = vmatmul.f32.gmra.mxu0 %v83
    %v182 = vpop.f32.mrf.mxu0
    %v183 = vadd.f32 %v118, %v182
    %184 = vmatmul.f32.gmra.mxu0 %v84
    %v185 = vpop.f32.mrf.mxu0
    %v186 = vadd.f32 %v118, %v185
    %187 = vmatmul.f32.gmra.mxu0 %v85
    %v188 = vpop.f32.mrf.mxu0
    %v189 = vadd.f32 %v118, %v188
    %190 = vmatmul.f32.gmra.mxu0 %v86
    %v191 = vpop.f32.mrf.mxu0
    %v192 = vadd.f32 %v118, %v191
    %193 = vmatmul.f32.gmra.mxu0 %v87
    %v194 = vpop.f32.mrf.mxu0
    %v195 = vadd.f32 %v118, %v194
    %196 = vmatmul.f32.gmra.mxu0 %v88
    %v197 = vpop.f32.mrf.mxu0
    %v198 = vadd.f32 %v118, %v197
    %199 = vmatmul.f32.gmra.mxu0 %v89
    %v200 = vpop.f32.mrf.mxu0
    %v201 = vadd.f32 %v118, %v200
    %202 = vmatmul.f32.gmra.mxu0 %v90
    %v203 = vpop.f32.mrf.mxu0
    %v204 = vadd.f32 %v118, %v203
    %205 = vmatmul.f32.gmra.mxu0 %v91
    %v206 = vpop.f32.mrf.mxu0
    %v207 = vadd.f32 %v118, %v206
    %208 = vmatmul.f32.gmra.mxu0 %v92
    %v209 = vpop.f32.mrf.mxu0
    %v210 = vadd.f32 %v118, %v209
    %211 = vmatmul.f32.gmra.mxu0 %v93
    %v212 = vpop.f32.mrf.mxu0
    %v213 = vadd.f32 %v118, %v212
    %214 = vmatmul.f32.gmra.mxu0 %v94
    %v215 = vpop.f32.mrf.mxu0
    %v216 = vadd.f32 %v118, %v215
    %217 = vmatmul.f32.gmra.mxu0 %v95
    %v218 = vpop.f32.mrf.mxu0
    %v219 = vadd.f32 %v118, %v218
    %220 = vmatmul.f32.gmra.mxu0 %v96
    %v221 = vpop.f32.mrf.mxu0
    %v222 = vadd.f32 %v118, %v221
    %223 = vmatmul.f32.gmra.mxu0 %v97
    %v224 = vpop.f32.mrf.mxu0
    %v225 = vadd.f32 %v118, %v224
    %226 = vmatmul.f32.gmra.mxu0 %v98
    %v227 = vpop.f32.mrf.mxu0
    %v228 = vadd.f32 %v118, %v227
    %229 = vmatmul.f32.gmra.mxu0 %v99
    %v230 = vpop.f32.mrf.mxu0
    %v231 = vadd.f32 %v118, %v230
    %232 = vdwg.mxu0
    %v233 = vmax.f32 %v138, 0.0
    %v234 = vmax.f32 %v141, 0.0
    %v235 = vmax.f32 %v144, 0.0
    %v236 = vmax.f32 %v147, 0.0
    %v237 = vmax.f32 %v150, 0.0
    %v238 = vmax.f32 %v153, 0.0
    %v239 = vmax.f32 %v156, 0.0
    %v240 = vmax.f32 %v159, 0.0
    %v241 = vmax.f32 %v162, 0.0
    %v242 = vmax.f32 %v165, 0.0
    %v243 = vmax.f32 %v168, 0.0
    %v244 = vmax.f32 %v171, 0.0
    %v245 = vmax.f32 %v174, 0.0
    %v246 = vmax.f32 %v177, 0.0
    %v247 = vmax.f32 %v180, 0.0
    %v248 = vmax.f32 %v183, 0.0
    %v249 = vmax.f32 %v186, 0.0
    %v250 = vmax.f32 %v189, 0.0
    %v251 = vmax.f32 %v192, 0.0
    %v252 = vmax.f32 %v195, 0.0
    %v253 = vmax.f32 %v198, 0.0
    %v254 = vmax.f32 %v201, 0.0
    %v255 = vmax.f32 %v204, 0.0
    %v256 = vmax.f32 %v207, 0.0
    %v257 = vmax.f32 %v210, 0.0
    %v258 = vmax.f32 %v213, 0.0
    %v259 = vmax.f32 %v216, 0.0
    %v260 = vmax.f32 %v219, 0.0
    %v261 = vmax.f32 %v222, 0.0
    %v262 = vmax.f32 %v225, 0.0
    %v263 = vmax.f32 %v228, 0.0
    %v264 = vmax.f32 %v231, 0.0
    %v265 = vld [vmem:[#allocation7] sm:$0xff]
    %v266 = vld [vmem:[#allocation7 + $0x8] sm:$0xff]
    %v267 = vld [vmem:[#allocation7 + $0x10] sm:$0xff]
    %v268 = vld [vmem:[#allocation7 + $0x18] sm:$0xff]
    %v269 = vld [vmem:[#allocation7 + $0x20] sm:$0xff]
    %v270 = vld [vmem:[#allocation7 + $0x28] sm:$0xff]
    %v271 = vld [vmem:[#allocation7 + $0x30] sm:$0xff]
    %v272 = vld [vmem:[#allocation7 + $0x38] sm:$0xff]
    %v273 = vld [vmem:[#allocation7 + $0x40] sm:$0xff]
    %v274 = vld [vmem:[#allocation7 + $0x48] sm:$0xff]
    %v275 = vld [vmem:[#allocation7 + $0x50] sm:$0xff]
    %v276 = vld [vmem:[#allocation7 + $0x58] sm:$0xff]
    %v277 = vld [vmem:[#allocation7 + $0x60] sm:$0xff]
    %v278 = vld [vmem:[#allocation7 + $0x68] sm:$0xff]
    %v279 = vld [vmem:[#allocation7 + $0x70] sm:$0xff]
    %v280 = vld [vmem:[#allocation7 + $0x78] sm:$0xff]
    %v281 = vld [vmem:[%s4] sm:$0x1]
    %v283 = vperm.slane %v281, 0
    %285 = vmatpush.msra.mxu0 %v280
    %286 = vmatpush.msra.mxu0 %v279
    %287 = vmatpush.msra.mxu0 %v278
    %288 = vmatpush.msra.mxu0 %v277
    %289 = vmatpush.msra.mxu0 %v276
    %290 = vmatpush.msra.mxu0 %v275
    %291 = vmatpush.msra.mxu0 %v274
    %292 = vmatpush.msra.mxu0 %v273
    %293 = vmatpush.msra.mxu0 %v272
    %294 = vmatpush.msra.mxu0 %v271
    %295 = vmatpush.msra.mxu0 %v270
    %296 = vmatpush.msra.mxu0 %v269
    %297 = vmatpush.msra.mxu0 %v268
    %298 = vmatpush.msra.mxu0 %v267
    %299 = vmatpush.msra.mxu0 %v266
    %300 = vmatpush.msra.mxu0 %v265
    %301 = vmatmul.f32.gmra.mxu0 %v233
    %v302 = vpop.f32.mrf.mxu0
    %v303 = vadd.f32 %v283, %v302
    %304 = vmatmul.f32.gmra.mxu0 %v234
    %v305 = vpop.f32.mrf.mxu0
    %v306 = vadd.f32 %v283, %v305
    %307 = vmatmul.f32.gmra.mxu0 %v235
    %v308 = vpop.f32.mrf.mxu0
    %v309 = vadd.f32 %v283, %v308
    %310 = vmatmul.f32.gmra.mxu0 %v236
    %v311 = vpop.f32.mrf.mxu0
    %v312 = vadd.f32 %v283, %v311
    %313 = vmatmul.f32.gmra.mxu0 %v237
    %v314 = vpop.f32.mrf.mxu0
    %v315 = vadd.f32 %v283, %v314
    %316 = vmatmul.f32.gmra.mxu0 %v238
    %v317 = vpop.f32.mrf.mxu0
    %v318 = vadd.f32 %v283, %v317
    %319 = vmatmul.f32.gmra.mxu0 %v239
    %v320 = vpop.f32.mrf.mxu0
    %v321 = vadd.f32 %v283, %v320
    %322 = vmatmul.f32.gmra.mxu0 %v240
    %v323 = vpop.f32.mrf.mxu0
    %v324 = vadd.f32 %v283, %v323
    %325 = vmatmul.f32.gmra.mxu0 %v241
    %v326 = vpop.f32.mrf.mxu0
    %v327 = vadd.f32 %v283, %v326
    %328 = vmatmul.f32.gmra.mxu0 %v242
    %v329 = vpop.f32.mrf.mxu0
    %v330 = vadd.f32 %v283, %v329
    %331 = vmatmul.f32.gmra.mxu0 %v243
    %v332 = vpop.f32.mrf.mxu0
    %v333 = vadd.f32 %v283, %v332
    %334 = vmatmul.f32.gmra.mxu0 %v244
    %v335 = vpop.f32.mrf.mxu0
    %v336 = vadd.f32 %v283, %v335
    %337 = vmatmul.f32.gmra.mxu0 %v245
    %v338 = vpop.f32.mrf.mxu0
    %v339 = vadd.f32 %v283, %v338
    %340 = vmatmul.f32.gmra.mxu0 %v246
    %v341 = vpop.f32.mrf.mxu0
    %v342 = vadd.f32 %v283, %v341
    %343 = vmatmul.f32.gmra.mxu0 %v247
    %v344 = vpop.f32.mrf.mxu0
    %v345 = vadd.f32 %v283, %v344
    %346 = vmatmul.f32.gmra.mxu0 %v248
    %v347 = vpop.f32.mrf.mxu0
    %v348 = vadd.f32 %v283, %v347
    %349 = vmatmul.f32.gmra.mxu0 %v249
    %v350 = vpop.f32.mrf.mxu0
    %v351 = vadd.f32 %v283, %v350
    %352 = vmatmul.f32.gmra.mxu0 %v250
    %v353 = vpop.f32.mrf.mxu0
    %v354 = vadd.f32 %v283, %v353
    %355 = vmatmul.f32.gmra.mxu0 %v251
    %v356 = vpop.f32.mrf.mxu0
    %v357 = vadd.f32 %v283, %v356
    %358 = vmatmul.f32.gmra.mxu0 %v252
    %v359 = vpop.f32.mrf.mxu0
    %v360 = vadd.f32 %v283, %v359
    %361 = vmatmul.f32.gmra.mxu0 %v253
    %v362 = vpop.f32.mrf.mxu0
    %v363 = vadd.f32 %v283, %v362
    %364 = vmatmul.f32.gmra.mxu0 %v254
    %v365 = vpop.f32.mrf.mxu0
    %v366 = vadd.f32 %v283, %v365
    %367 = vmatmul.f32.gmra.mxu0 %v255
    %v368 = vpop.f32.mrf.mxu0
    %v369 = vadd.f32 %v283, %v368
    %370 = vmatmul.f32.gmra.mxu0 %v256
    %v371 = vpop.f32.mrf.mxu0
    %v372 = vadd.f32 %v283, %v371
    %373 = vmatmul.f32.gmra.mxu0 %v257
    %v374 = vpop.f32.mrf.mxu0
    %v375 = vadd.f32 %v283, %v374
    %376 = vmatmul.f32.gmra.mxu0 %v258
    %v377 = vpop.f32.mrf.mxu0
    %v378 = vadd.f32 %v283, %v377
    %379 = vmatmul.f32.gmra.mxu0 %v259
    %v380 = vpop.f32.mrf.mxu0
    %v381 = vadd.f32 %v283, %v380
    %382 = vmatmul.f32.gmra.mxu0 %v260
    %v383 = vpop.f32.mrf.mxu0
    %v384 = vadd.f32 %v283, %v383
    %385 = vmatmul.f32.gmra.mxu0 %v261
    %v386 = vpop.f32.mrf.mxu0
    %v387 = vadd.f32 %v283, %v386
    %388 = vmatmul.f32.gmra.mxu0 %v262
    %v389 = vpop.f32.mrf.mxu0
    %v390 = vadd.f32 %v283, %v389
    %391 = vmatmul.f32.gmra.mxu0 %v263
    %v392 = vpop.f32.mrf.mxu0
    %v393 = vadd.f32 %v283, %v392
    %394 = vmatmul.f32.gmra.mxu0 %v264
    %v395 = vpop.f32.mrf.mxu0
    %v396 = vadd.f32 %v283, %v395
    %397 = vdwg.mxu0
    %398 = vst [vmem:[#allocation8] sm:$0xff] %v303
    %399 = vst [vmem:[#allocation8 + $0x8] sm:$0xff] %v306
    %400 = vst [vmem:[#allocation8 + $0x10] sm:$0xff] %v309
    %401 = vst [vmem:[#allocation8 + $0x18] sm:$0xff] %v312
    %402 = vst [vmem:[#allocation8 + $0x20] sm:$0xff] %v315
    %403 = vst [vmem:[#allocation8 + $0x28] sm:$0xff] %v318
    %404 = vst [vmem:[#allocation8 + $0x30] sm:$0xff] %v321
    %405 = vst [vmem:[#allocation8 + $0x38] sm:$0xff] %v324
    %406 = vst [vmem:[#allocation8 + $0x40] sm:$0xff] %v327
    %407 = vst [vmem:[#allocation8 + $0x48] sm:$0xff] %v330
    %408 = vst [vmem:[#allocation8 + $0x50] sm:$0xff] %v333
    %409 = vst [vmem:[#allocation8 + $0x58] sm:$0xff] %v336
    %410 = vst [vmem:[#allocation8 + $0x60] sm:$0xff] %v339
    %411 = vst [vmem:[#allocation8 + $0x68] sm:$0xff] %v342
    %412 = vst [vmem:[#allocation8 + $0x70] sm:$0xff] %v345
    %413 = vst [vmem:[#allocation8 + $0x78] sm:$0xff] %v348
    %414 = vst [vmem:[#allocation8 + $0x80] sm:$0xff] %v351
    %415 = vst [vmem:[#allocation8 + $0x88] sm:$0xff] %v354
    %416 = vst [vmem:[#allocation8 + $0x90] sm:$0xff] %v357
    %417 = vst [vmem:[#allocation8 + $0x98] sm:$0xff] %v360
    %418 = vst [vmem:[#allocation8 + $0xa0] sm:$0xff] %v363
    %419 = vst [vmem:[#allocation8 + $0xa8] sm:$0xff] %v366
    %420 = vst [vmem:[#allocation8 + $0xb0] sm:$0xff] %v369
    %421 = vst [vmem:[#allocation8 + $0xb8] sm:$0xff] %v372
    %422 = vst [vmem:[#allocation8 + $0xc0] sm:$0xff] %v375
    %423 = vst [vmem:[#allocation8 + $0xc8] sm:$0xff] %v378
    %424 = vst [vmem:[#allocation8 + $0xd0] sm:$0xff] %v381
    %425 = vst [vmem:[#allocation8 + $0xd8] sm:$0xff] %v384
    %426 = vst [vmem:[#allocation8 + $0xe0] sm:$0xff] %v387
    %427 = vst [vmem:[#allocation8 + $0xe8] sm:$0xff] %v390
    %428 = vst [vmem:[#allocation8 + $0xf0] sm:$0xff] %v393
    %429 = vst [vmem:[#allocation8 + $0xf8] sm:$0xff] %v396
    // Predicated region
    $region34: #{tpu_custom_call.1} parent=1 // pred_check
      _
    $region35: #{tpu_custom_call.1} parent=1 // pred_check_branch
      %431 = sbr.rel (0) target = $region37
    $region36: #{tpu_custom_call.1} parent=1 // pred_region
      %433 = vsyncadd [#allocation4], 0
      %s434 = sshll.u32 [#allocation8], 4
      %s435 = int_to_ptr.vmem [resolvable:$true] %s434
      %s436 = sshll.u32 %s5, 4
      %s437 = int_to_ptr.hbm [resolvable:$true] %s436
      %442 = dma.vmem_to_hbm [thread:$0]  %s435, 4096, %s437, [#allocation4], 128, 128, 8
    $region37: #{tpu_custom_call.1} parent=1 // pred_fallthru
      _
    // Predicated region
    $region38: #{tpu_custom_call.1} parent=1 // pred_check
      _
    $region39: #{tpu_custom_call.1} parent=1 // pred_check_branch
      %444 = sbr.rel (0) target = $region41
    $region40: #{tpu_custom_call.1} parent=1 // pred_region
      %446 = dma.done [#allocation4], 4096
    $region41: #{tpu_custom_call.1} parent=1 // pred_fallthru
      _
    %447 = vsyncpa [#allocation3], 1
    %448 = vsyncpa [#allocation6], 1
    %449 = vsyncpa [#allocation4], 1

</llo_original>
